<compile_context>
chip_gen: v7x
topology: tpu7x:2x2x1
jax: 0.10.0
libtpu: 0.0.40
codegen_flags: <defaults>
</compile_context>

<pallas_src>
import math
import functools

import jax
import jax.numpy as jnp
from jax.experimental import pallas as pl
from jax.experimental.pallas import tpu as pltpu


TILE_N = 128   # node-row tile (raise to 512-1024 for production graphs)
TILE_E = 128   # edge-row tile
VMEM_LIMIT = 32 * 1024 * 1024   # v7x: cap ~48-56 MiB; v5e/v6e can go ~96-100 MiB


def _cdiv(a, b):
    return (a + b - 1) // b


def _round_up(a, m):
    return _cdiv(a, m) * m


# ---------------------------------------------------------------------------
# Kernel 1: fused typed linear  y[i] = x[i] @ W_kqvr[type_of(i)]   (bf16 out)
# Node rows are laid out so each ntype segment is padded to a multiple of TILE_N;
# the scalar-prefetched tile->type map picks the single weight per tile.
# ---------------------------------------------------------------------------
def _typed_matmul_kernel(tt_ref, x_ref, w_ref, o_ref):
    del tt_ref  # only consumed by the index_maps
    x = x_ref[...].astype(jnp.bfloat16)
    o_ref[...] = jnp.dot(x, w_ref[0],
                         preferred_element_type=jnp.float32).astype(jnp.bfloat16)


def typed_matmul(x, w_bf16, tile_type):
    n_pad, d_in = x.shape
    _, _, d_out = w_bf16.shape
    grid_spec = pltpu.PrefetchScalarGridSpec(
        num_scalar_prefetch=1,
        grid=(n_pad // TILE_N,),
        in_specs=[
            pl.BlockSpec((TILE_N, d_in), lambda i, tt: (i, 0)),
            pl.BlockSpec((1, d_in, d_out), lambda i, tt: (tt[i], 0, 0)),
        ],
        out_specs=pl.BlockSpec((TILE_N, d_out), lambda i, tt: (i, 0)),
    )
    return pl.pallas_call(
        _typed_matmul_kernel,
        grid_spec=grid_spec,
        out_shape=jax.ShapeDtypeStruct((n_pad, d_out), jnp.bfloat16),
        compiler_params=pltpu.CompilerParams(
            dimension_semantics=("parallel",), vmem_limit_bytes=VMEM_LIMIT),
    )(tile_type, x, w_bf16)


# ---------------------------------------------------------------------------
# Kernel 2: per-edge relation attention scores (heads fused, prior folded in).
# scores = ((k @ W_att_bd) * q) @ pri_indicator  -> (TILE_E, HP)
# The score buffer is only O(E * HP * 4) bytes and is touched once per edge
# (it never enters the hot aggregation loop), so its narrow lane width is cheap.
# ---------------------------------------------------------------------------
def _edge_scores_kernel(te_ref, k_ref, q_ref, watt_ref, pri_ref, a_ref):
    del te_ref
    kw = jnp.dot(k_ref[...], watt_ref[0], preferred_element_type=jnp.float32)
    kwq = kw * q_ref[...].astype(jnp.float32)
    # per-head sum + relation prior / sqrt(D) fused into one small f32 indicator matmul
    a_ref[...] = jnp.dot(kwq, pri_ref[0], preferred_element_type=jnp.float32)


def edge_scores(k_e, q_e, tile_etype, watt_bd, pri_ind):
    e_pad, hd = k_e.shape
    hp = pri_ind.shape[2]
    grid_spec = pltpu.PrefetchScalarGridSpec(
        num_scalar_prefetch=1,
        grid=(e_pad // TILE_E,),
        in_specs=[
            pl.BlockSpec((TILE_E, hd), lambda j, te: (j, 0)),
            pl.BlockSpec((TILE_E, hd), lambda j, te: (j, 0)),
            pl.BlockSpec((1, hd, hd), lambda j, te: (te[j], 0, 0)),
            pl.BlockSpec((1, hd, hp), lambda j, te: (te[j], 0, 0)),
        ],
        out_specs=pl.BlockSpec((TILE_E, hp), lambda j, te: (j, 0)),
    )
    return pl.pallas_call(
        _edge_scores_kernel,
        grid_spec=grid_spec,
        out_shape=jax.ShapeDtypeStruct((e_pad, hp), jnp.float32),
        compiler_params=pltpu.CompilerParams(
            dimension_semantics=("parallel",), vmem_limit_bytes=VMEM_LIMIT),
    )(tile_etype, k_e, q_e, watt_bd, pri_ind)


# ---------------------------------------------------------------------------
# Kernel 2b: per-edge softmax weighting + relation message, done ONCE per edge.
# Packs [m * exp(a - stab) | exp(a - stab) | 0-pad] into a lane-dense bf16 block
# (width rounded up to a multiple of 128) so the aggregation kernel needs a single
# matmul per (node tile, edge tile) for both numerator and denominator.
# ---------------------------------------------------------------------------
def _edge_softmax_msg_kernel(te_ref, a_ref, stab_ref, v_ref, wmsg_ref, bca_ref,
                             o_ref, *, pad):
    del te_ref
    expa = jnp.exp(a_ref[...] - stab_ref[...])                          # (TE, HP) f32
    expa_hd = jnp.dot(expa, bca_ref[...], preferred_element_type=jnp.float32)
    m = jnp.dot(v_ref[...], wmsg_ref[0], preferred_element_type=jnp.float32)
    wm = m * expa_hd                                                     # (TE, HD) f32
    pieces = [wm, expa]
    if pad:
        pieces.append(jnp.zeros((wm.shape[0], pad), jnp.float32))
    o_ref[...] = jnp.concatenate(pieces, axis=1).astype(jnp.bfloat16)


def edge_softmax_msg(a_e, stab_e, v_e, tile_etype, wmsg_bd, bcast_ind):
    e_pad, hp = a_e.shape
    hd = v_e.shape[1]
    w_ext = _round_up(hd + hp, 128)
    pad = w_ext - hd - hp
    kern = functools.partial(_edge_softmax_msg_kernel, pad=pad)
    grid_spec = pltpu.PrefetchScalarGridSpec(
        num_scalar_prefetch=1,
        grid=(e_pad // TILE_E,),
        in_specs=[
            pl.BlockSpec((TILE_E, hp), lambda j, te: (j, 0)),
            pl.BlockSpec((TILE_E, hp), lambda j, te: (j, 0)),
            pl.BlockSpec((TILE_E, hd), lambda j, te: (j, 0)),
            pl.BlockSpec((1, hd, hd), lambda j, te: (te[j], 0, 0)),
            pl.BlockSpec((hp, hd), lambda j, te: (0, 0)),
        ],
        out_specs=pl.BlockSpec((TILE_E, w_ext), lambda j, te: (j, 0)),
    )
    return pl.pallas_call(
        kern,
        grid_spec=grid_spec,
        out_shape=jax.ShapeDtypeStruct((e_pad, w_ext), jnp.bfloat16),
        compiler_params=pltpu.CompilerParams(
            dimension_semantics=("parallel",), vmem_limit_bytes=VMEM_LIMIT),
    )(tile_etype, a_e, stab_e, v_e, wmsg_bd, bcast_ind)


# ---------------------------------------------------------------------------
# Kernel 3 (fused): aggregation (softmax numerator + denominator in one matmul),
# GELU + typed output projection + sigmoid-skip residual mix.
# grid = (node tiles [parallel], edge tiles [arbitrary]); accumulate in VMEM scratch.
# Empty incidence tiles are skipped via a scalar-prefetched nonzero-count map.
# ---------------------------------------------------------------------------
def _gelu_tanh(x):
    # tanh-approximate GELU (EUP tanh); ~3e-3 max abs error vs exact erf GELU.
    c = 0.7978845608028654  # sqrt(2/pi)
    return 0.5 * x * (1.0 + jnp.tanh(c * (x + 0.044715 * x * x * x)))


def _agg_output_kernel(tt_ref, nnz_ref, wm_ref, inc_ref, wa_ref, bca_ref, alpha_ref,
                       resid_ref, out_ref, acc_ref, *, hd, hp):
    del tt_ref  # only consumed by the index_maps
    i = pl.program_id(0)
    j = pl.program_id(1)
    nj = pl.num_programs(1)

    @pl.when(j == 0)
    def _():
        acc_ref[...] = jnp.zeros_like(acc_ref)

    # Skip all-zero incidence tiles (most tiles on real sparse graphs).
    # TODO(synk): additionally sort edges by destination so incidence is block-banded
    # and restrict the j range via the index_map (skips the DMA too).
    @pl.when(nnz_ref[i * nj + j] > 0)
    def _():
        acc_ref[...] += jnp.dot(inc_ref[...], wm_ref[...],
                                preferred_element_type=jnp.float32)

    @pl.when(j == nj - 1)
    def _():
        acc = acc_ref[...]
        num = acc[:, :hd]                                   # softmax numerator
        den = acc[:, hd:hd + hp]                            # softmax denominator (per head)
        den_hd = jnp.dot(den, bca_ref[...], preferred_element_type=jnp.float32)
        safe_den = jnp.where(den_hd > 0.0, den_hd, 1.0)     # zero-in-degree guard
        h_agg = num * pl.reciprocal(safe_den, approx=True)
        h_act = _gelu_tanh(h_agg)
        lin = jnp.dot(h_act.astype(jnp.bfloat16), wa_ref[0],
                      preferred_element_type=jnp.float32)
        alpha = alpha_ref[0]                                # (1, HD) sigmoid(skip[type])
        mix = lin * alpha + resid_ref[...].astype(jnp.float32) * (1.0 - alpha)
        out_ref[...] = mix.astype(out_ref.dtype)


def agg_output(wm_ext, inc, wa_bf16, bcast_ind, alpha_hd, resid, tile_ntype, tile_nnz,
               num_heads, head_size, out_dtype):
    e_pad, w_ext = wm_ext.shape
    n_pad = inc.shape[0]
    hd = num_heads * head_size
    hp = bcast_ind.shape[0]
    ni, nj = n_pad // TILE_N, e_pad // TILE_E
    kern = functools.partial(_agg_output_kernel, hd=hd, hp=hp)
    grid_spec = pltpu.PrefetchScalarGridSpec(
        num_scalar_prefetch=2,
        grid=(ni, nj),
        in_specs=[
            pl.BlockSpec((TILE_E, w_ext), lambda i, j, tt, nnz: (j, 0)),   # packed msgs
            pl.BlockSpec((TILE_N, TILE_E), lambda i, j, tt, nnz: (i, j)),  # dst incidence
            pl.BlockSpec((1, hd, hd), lambda i, j, tt, nnz: (tt[i], 0, 0)),  # typed proj
            pl.BlockSpec((hp, hd), lambda i, j, tt, nnz: (0, 0)),          # head bcast
            pl.BlockSpec((1, 1, hd), lambda i, j, tt, nnz: (tt[i], 0, 0)),  # sigmoid(skip)
            pl.BlockSpec((TILE_N, hd), lambda i, j, tt, nnz: (i, 0)),      # residual
        ],
        out_specs=pl.BlockSpec((TILE_N, hd), lambda i, j, tt, nnz: (i, 0)),
        scratch_shapes=[pltpu.VMEM((TILE_N, w_ext), jnp.float32)],
    )
    return pl.pallas_call(
        kern,
        grid_spec=grid_spec,
        out_shape=jax.ShapeDtypeStruct((n_pad, hd), out_dtype),
        compiler_params=pltpu.CompilerParams(
            dimension_semantics=("parallel", "arbitrary"),
            vmem_limit_bytes=VMEM_LIMIT),
    )(tile_ntype, tile_nnz, wm_ext, inc, wa_bf16, bcast_ind, alpha_hd, resid)


# ---------------------------------------------------------------------------
# Parameters (deterministic init, shapes match DGL HGTConv)
# ---------------------------------------------------------------------------
def _xavier(key, shape, fan_in, fan_out):
    bound = math.sqrt(6.0 / (fan_in + fan_out))
    return jax.random.uniform(key, shape, jnp.float32, -bound, bound)


def init_hgt_conv(key, in_size, head_size, num_heads, num_ntypes, num_etypes):
    HD = head_size * num_heads
    ks = jax.random.split(key, 7)
    p = dict(
        num_heads=num_heads,
        head_size=head_size,
        w_k=_xavier(ks[0], (num_ntypes, in_size, HD), in_size, HD),
        w_q=_xavier(ks[1], (num_ntypes, in_size, HD), in_size, HD),
        w_v=_xavier(ks[2], (num_ntypes, in_size, HD), in_size, HD),
        w_a=_xavier(ks[3], (num_ntypes, HD, HD), HD, HD),
        w_att=_xavier(ks[4], (num_heads * num_etypes, head_size, head_size),
                      head_size, head_size),
        w_msg=_xavier(ks[5], (num_heads * num_etypes, head_size, head_size),
                      head_size, head_size),
        pri=jnp.ones((num_heads, num_etypes), jnp.float32),     # relation_pri init = 1
        skip=jnp.ones((num_ntypes, 1), jnp.float32),            # skip init = 1
    )
    if in_size != HD:
        p["w_res"] = _xavier(ks[6], (1, in_size, HD), in_size, HD)
    return p


def init_hgt(key, in_dim, hidden_dim, out_dim, num_heads, num_etypes, num_ntypes,
             num_layers):
    keys = jax.random.split(key, num_layers)
    layers = [init_hgt_conv(keys[0], in_dim, hidden_dim, num_heads, num_ntypes,
                            num_etypes)]
    for l in range(1, num_layers - 1):
        layers.append(init_hgt_conv(keys[l], hidden_dim * num_heads, hidden_dim,
                                    num_heads, num_ntypes, num_etypes))
    layers.append(init_hgt_conv(keys[num_layers - 1], hidden_dim * num_heads, out_dim,
                                1, num_ntypes, num_etypes))
    return layers


def prepare_conv(p):
    """Build kernel-ready (fused / block-diagonal / bf16) weights from raw params."""
    H, D = p["num_heads"], p["head_size"]
    HD = H * D
    HP = _round_up(H, 8)          # padded head axis for the small indicator matmuls
    R = p["pri"].shape[1]
    T = p["w_k"].shape[0]

    ws = [p["w_k"], p["w_q"], p["w_v"]]
    has_res = "w_res" in p
    if has_res:
        ws.append(jnp.broadcast_to(p["w_res"], (T,) + p["w_res"].shape[1:]))
    w_kqvr = jnp.concatenate(ws, axis=-1).astype(jnp.bfloat16)   # (T, in, 3HD or 4HD)

    # NOTE: assumes head-major ordering w[h*R + r] of the relation_att / relation_msg
    # weights (verify against DGL TypedLinear if bit-matching a reference checkpoint).
    def block_diag(w):
        out = jnp.zeros((R, HD, HD), jnp.float32)
        for h in range(H):
            for r in range(R):
                out = out.at[r, h * D:(h + 1) * D, h * D:(h + 1) * D].set(w[h * R + r])
        return out.astype(jnp.bfloat16)

    # per-relation indicator that sums each head's D lanes and applies pri/sqrt(D)
    pri_ind = jnp.zeros((R, HD, HP), jnp.float32)
    for h in range(H):
        for r in range(R):
            pri_ind = pri_ind.at[r, h * D:(h + 1) * D, h].set(
                p["pri"][h, r] / math.sqrt(D))

    # head -> head*D broadcast indicator (padded head rows are zero)
    bcast_ind = jnp.zeros((HP, HD), jnp.float32)
    for h in range(H):
        bcast_ind = bcast_ind.at[h, h * D:(h + 1) * D].set(1.0)

    alpha_hd = jnp.broadcast_to(jax.nn.sigmoid(p["skip"]).reshape(T, 1, 1),
                                (T, 1, HD)).astype(jnp.float32)

    return dict(
        num_heads=H, head_size=D, has_res=has_res,
        w_kqvr=w_kqvr,
        w_att_bd=block_diag(p["w_att"]),
        w_msg_bd=block_diag(p["w_msg"]),
        pri_ind=pri_ind,
        bcast_ind=bcast_ind,
        w_a=p["w_a"].astype(jnp.bfloat16),
        alpha_hd=alpha_hd,
    )


# ---------------------------------------------------------------------------
# Graph layout: emulate dgl.to_homogeneous (nodes sorted by ntype, edges by etype,
# presorted=True), padding each type segment to a multiple of the row tile so every
# grid step belongs to exactly one type.
# ---------------------------------------------------------------------------
def build_graph_layout(n_per_type, e_per_type, src, dst):
    T, R = len(n_per_type), len(e_per_type)

    n_tiles = [_cdiv(c, TILE_N) for c in n_per_type]
    new_off, o = [], 0
    for t in range(T):
        new_off.append(o)
        o += n_tiles[t] * TILE_N
    n_pad = o
    old2new = jnp.concatenate(
        [new_off[t] + jnp.arange(n_per_type[t], dtype=jnp.int32) for t in range(T)])
    tile_ntype = jnp.concatenate(
        [jnp.full((n_tiles[t],), t, jnp.int32) for t in range(T)])

    e_tiles = [_cdiv(c, TILE_E) for c in e_per_type]
    e_new_off, o = [], 0
    for r in range(R):
        e_new_off.append(o)
        o += e_tiles[r] * TILE_E
    e_pad = o
    e_old2new = jnp.concatenate(
        [e_new_off[r] + jnp.arange(e_per_type[r], dtype=jnp.int32) for r in range(R)])
    tile_etype = jnp.concatenate(
        [jnp.full((e_tiles[r],), r, jnp.int32) for r in range(R)])

    src_pad = jnp.zeros((e_pad,), jnp.int32).at[e_old2new].set(old2new[src])
    dst_pad = jnp.zeros((e_pad,), jnp.int32).at[e_old2new].set(old2new[dst])
    valid_e = jnp.zeros((e_pad,), jnp.float32).at[e_old2new].set(1.0)

    # dense 0/1 destination incidence, bf16 (exact for 0/1), invalid edges zeroed.
    # TODO(synk): replace with a block-sparse / dst-sorted segment formulation for
    # large graphs -- dense (N, E) incidence does not scale.
    inc = ((dst_pad[None, :] == jnp.arange(n_pad, dtype=jnp.int32)[:, None])
           & (valid_e[None, :] > 0)).astype(jnp.bfloat16)

    # per-(node tile, edge tile) valid-edge counts -> skip all-zero incidence tiles
    ni, nj = n_pad // TILE_N, e_pad // TILE_E
    dst_tile = dst_pad // TILE_N
    edge_tile = jnp.arange(e_pad, dtype=jnp.int32) // TILE_E
    tile_nnz = (jnp.zeros((ni, nj), jnp.int32)
                .at[dst_tile, edge_tile].add(valid_e.astype(jnp.int32))
                .reshape(-1))

    return dict(n_pad=n_pad, e_pad=e_pad, old2new=old2new,
                tile_ntype=tile_ntype, tile_etype=tile_etype, tile_nnz=tile_nnz,
                src=src_pad, dst=dst_pad, valid_e=valid_e, inc=inc)


# ---------------------------------------------------------------------------
# HGTConv forward (one layer)
# ---------------------------------------------------------------------------
def hgt_conv_forward(pc, x_pad, g, out_dtype):
    H, D = pc["num_heads"], pc["head_size"]
    HD = H * D
    n_pad = x_pad.shape[0]

    # fused typed K/Q/V (+ optional residual) projection: one pass over x, bf16 out
    kqvr = typed_matmul(x_pad, pc["w_kqvr"], g["tile_ntype"])
    k, q, v = kqvr[:, :HD], kqvr[:, HD:2 * HD], kqvr[:, 2 * HD:3 * HD]
    resid = (kqvr[:, 3 * HD:4 * HD] if pc["has_res"]
             else x_pad.astype(jnp.bfloat16))

    # gather node features onto edges (plain-JAX glue)
    # TODO(synk): fuse into the edge kernels via scalar-prefetched src/dst indices and
    # manual DMA row gather (memory_space=pl.ANY + make_async_copy).
    k_e = jnp.take(k, g["src"], axis=0)
    q_e = jnp.take(q, g["dst"], axis=0)
    v_e = jnp.take(v, g["src"], axis=0)

    a_e = edge_scores(k_e, q_e, g["tile_etype"], pc["w_att_bd"], pc["pri_ind"])

    # per-destination max for a numerically stable edge softmax (scatter-max glue)
    # TODO(synk): fold into a dst-sorted segment / block-sparse Pallas kernel.
    neg = jnp.float32(-1e30)
    valid = g["valid_e"][:, None] > 0.0
    node_max = jnp.full((n_pad, a_e.shape[1]), neg, jnp.float32).at[g["dst"]].max(
        jnp.where(valid, a_e, neg))
    stab_e = jnp.where(valid, node_max[g["dst"]], jnp.float32(1e30))

    wm_ext = edge_softmax_msg(a_e, stab_e, v_e, g["tile_etype"],
                              pc["w_msg_bd"], pc["bcast_ind"])

    return agg_output(wm_ext, g["inc"], pc["w_a"], pc["bcast_ind"], pc["alpha_hd"],
                      resid, g["tile_ntype"], g["tile_nnz"], H, D, out_dtype)


# ---------------------------------------------------------------------------
# Full HGT forward (to_homogeneous -> layers -> to_hetero_feat)
# ---------------------------------------------------------------------------
def hgt_forward(layers, h_dict_list, n_per_type, e_per_type, src, dst):
    g = build_graph_layout(n_per_type, e_per_type, src, dst)
    x = jnp.concatenate(h_dict_list, axis=0).astype(jnp.float32)
    x_pad = jnp.zeros((g["n_pad"], x.shape[1]), jnp.float32).at[g["old2new"]].set(x)

    h = x_pad
    for li, pc in enumerate(layers):
        # intermediate layers stay bf16 (halves inter-layer HBM traffic); final is f32
        out_dtype = jnp.float32 if li == len(layers) - 1 else jnp.bfloat16
        h = hgt_conv_forward(pc, h, g, out_dtype)

    out, start = {}, 0
    for t, feat in enumerate(h_dict_list):
        n_t = feat.shape[0]
        out[f"ntype{t}"] = h[g["old2new"][start:start + n_t]]
        start += n_t
    return out


if __name__ == "__main__":
    key = jax.random.PRNGKey(0)
    in_dim, hidden_dim, out_dim = 16, 16, 16
    num_heads, num_ntypes, num_etypes, num_layers = 2, 2, 2, 2

    k1, k2, k3 = jax.random.split(key, 3)
    n_per_type = [5, 7]
    h_dict_list = [
        jax.random.normal(k1, (n_per_type[0], in_dim), jnp.float32),
        jax.random.normal(k2, (n_per_type[1], in_dim), jnp.float32),
    ]
    # homogeneous graph (dgl.to_homogeneous, presorted=True):
    # nodes: type0 -> 0..4, type1 -> 5..11 ; edges grouped by etype.
    src = jnp.array([0, 1, 2, 3, 4, 0, 1, 2, 5, 6, 7, 8, 9, 10, 11], jnp.int32)
    dst = jnp.array([5, 6, 7, 8, 9, 10, 11, 5, 0, 1, 2, 3, 4, 0, 1], jnp.int32)
    e_per_type = [8, 7]                      # edges presorted by etype

    raw_layers = init_hgt(k3, in_dim, hidden_dim, out_dim, num_heads,
                          num_etypes, num_ntypes, num_layers)
    layers = [prepare_conv(p) for p in raw_layers]

    out = hgt_forward(layers, h_dict_list, n_per_type, e_per_type, src, dst)
    out = jax.block_until_ready(out)

    assert out["ntype0"].shape == (5, out_dim)
    assert out["ntype1"].shape == (7, out_dim)
    assert all(bool(jnp.all(jnp.isfinite(v))) for v in out.values())
    print("KERNEL_OK")
</pallas_src>

<mosaic_0001>
module attributes {stable_mosaic.version = 11 : i64} {
  func.func @_typed_matmul_kernel(%arg0: i32, %arg1: memref<2xi32, #tpu.memory_space<smem>>, %arg2: memref<128x16xf32, #tpu.memory_space<vmem>>, %arg3: memref<1x16x128xbf16, #tpu.memory_space<vmem>>, %arg4: memref<128x128xbf16, #tpu.memory_space<vmem>>) attributes {dimension_semantics = [#tpu.dimension_semantics<parallel>], iteration_bounds = array<i64: 2>, scalar_prefetch = 1 : i64, scratch_operands = 0 : i64, tpu.core_type = #tpu.core_type<tc>, window_params = [{transform_indices = @transform_0, window_bounds = array<i64: 128, 16>}, {transform_indices = @transform_1, window_bounds = array<i64: 1, 16, 128>}, {transform_indices = @transform_2, window_bounds = array<i64: 128, 128>}]} {
    %c0 = arith.constant 0 : index
    %c0_0 = arith.constant 0 : index
    %0 = vector.load %arg2[%c0, %c0_0] : memref<128x16xf32, #tpu.memory_space<vmem>>, vector<128x16xf32>
    %1 = arith.truncf %0 : vector<128x16xf32> to vector<128x16xbf16>
    %c0_1 = arith.constant 0 : index
    %c0_2 = arith.constant 0 : index
    %c0_3 = arith.constant 0 : index
    %2 = vector.load %arg3[%c0_1, %c0_2, %c0_3] : memref<1x16x128xbf16, #tpu.memory_space<vmem>>, vector<1x16x128xbf16>
    %3 = vector.shape_cast %2 : vector<1x16x128xbf16> to vector<16x128xbf16>
    %cst = arith.constant dense<0.000000e+00> : vector<128x128xf32>
    %4 = tpu.matmul %1, %3, %cst {dimension_numbers = #tpu.dot_dimension_numbers<[1], [0], [0], [1], [0, 0, 1, 1], [], []>} : vector<128x16xbf16>, vector<16x128xbf16>, vector<128x128xf32> -> vector<128x128xf32>
    %5 = arith.truncf %4 : vector<128x128xf32> to vector<128x128xbf16>
    %c0_4 = arith.constant 0 : index
    %c0_5 = arith.constant 0 : index
    %6 = vector.load %arg4[%c0_4, %c0_5] : memref<128x128xbf16, #tpu.memory_space<vmem>>, vector<128x128xbf16>
    tpu.vector_store %arg4[%c0_4, %c0_5], %5 {strides = array<i32>} : memref<128x128xbf16, #tpu.memory_space<vmem>>, vector<128x128xbf16>,
    return
  }
  func.func @transform_0(%arg0: i32, %arg1: memref<2xi32, #tpu.memory_space<smem>>) -> (i32, i32) {
    %c0_i32 = arith.constant 0 : i32
    %c0_i32_0 = arith.constant 0 : i32
    return %arg0, %c0_i32 : i32, i32
  }
  func.func @transform_1(%arg0: i32, %arg1: memref<2xi32, #tpu.memory_space<smem>>) -> (i32, i32, i32) {
    %0 = arith.index_cast %arg0 : i32 to index
    %1 = memref.load %arg1[%0] : memref<2xi32, #tpu.memory_space<smem>>
    %c0_i32 = arith.constant 0 : i32
    %c0_i32_0 = arith.constant 0 : i32
    %c0_i32_1 = arith.constant 0 : i32
    return %1, %c0_i32, %c0_i32_0 : i32, i32, i32
  }
  func.func @transform_2(%arg0: i32, %arg1: memref<2xi32, #tpu.memory_space<smem>>) -> (i32, i32) {
    %c0_i32 = arith.constant 0 : i32
    %c0_i32_0 = arith.constant 0 : i32
    return %arg0, %c0_i32 : i32, i32
  }
}

</mosaic_0001>

<llo_original>
// kernel: tpu_custom_call.1
$region0: #{tpu_custom_call.1}
  #allocation0 [shape = 'u32[]', space=smem, size = 0x4, offset = 0x4, fixed_abs, tag = 'smem constant byte address 0x4 - core index']
  #allocation1 [shape = 'u32[144,128]{1,0:T(1,128)}', space=vmem, size = 0x12000, scoped, tag = 'internal scratch']
  #allocation2 [shape = 's32[1]{0}', space=sflag, size = 0x4, scoped, tag = 'scoped memory for tpu_custom_call.1']
  #allocation3 [shape = 'u8[512]{0}', space=smem, size = 0x200, scoped, tag = 'prefetched SMEM operand 0']
  %s0 = inlined_call_operand.vmem [shape: s32[2], index: 0, kind: input, shape index: {}]
  %s1 = inlined_call_operand.vmem [shape: f32[256,16], index: 1, kind: input, shape index: {}]
  %s2 = inlined_call_operand.vmem [shape: bf16[2,16,128], index: 2, kind: input, shape index: {}]
  %s3 = inlined_call_operand.hbm [shape: bf16[256,128], index: 3, kind: output, shape index: {}]
  %s4 = sld [smem:[#allocation0]]
  $region41: #{tpu_custom_call.1} parent=0
    _
  %s6 = ssub.s32 1, %s4
  %s7 = scalar_select 0, %s6, %s4
  %s8 = sshll.u32 %s0, 4
  %s9 = int_to_ptr.vmem [resolvable:$true] %s8
  %11 = dma.vmem_to_smem %s9, 16, [#allocation3], [#allocation2]
  %12 = dma.done [#allocation2], 16
  %13 = sfence
  $region1: #{tpu_custom_call.1} parent=0
    #allocation4 [shape = 'u8[65536]{0}', space=vmem, size = 0x10000, scoped, tag = 'output window, operand 0']
    #allocation5 [shape = 's32[2]{0}', space=sflag, size = 0x8, scoped, tag = 'scoped memory for tpu_custom_call.1']
    %14 = vsyncpa [#allocation5], 0
    %s15 = scalar_lea.sflag [#allocation5], 1
    %16 = vsyncpa %s15, 0
    loop: start=0, step=1, limit=4
    $region2: #{tpu_custom_call.1} parent=1 // loop_pre_header
      _
    $region3: #{tpu_custom_call.1} parent=1 // loop_header
      %s18 = sphi 0, %s22
      %p19 = scmp.ge.s32.totalorder %s18, 4
      %s28 = sphi 0, %s30
      %s31 = sphi 0, %s28
      %s32 = sphi 0, %s31
      %s48 = sphi 0, %s32
      %s56 = sphi 0, %s58
      %s59 = sphi 0, %s56
      %s60 = sphi 0, %s59
      %s76 = sphi 0, %s60
      %s82 = sphi 0, %s84
      %s85 = sphi 0, %s82
      %s86 = sphi 0, %s85
      %s102 = sphi 0, %s86
    $region4: #{tpu_custom_call.1} parent=1 // loop_header_branch
      %21 = sbr.rel (%p19) target = $region8
    $region5: #{tpu_custom_call.1} parent=1 // loop_body
      %s23 = ssub.s32 %s18, 1
      %s24 = ssub.s32 %s18, 2
      %s25 = sadd.s32 %s18, 1
      %s26 = ssub.s32 %s18, %s25
      %p27 = scmp.eq.s32.totalorder %s26, 0
      %s29 = sadd.s32 %s28, 1
      %s30 = scalar_select %p27, %s28, %s29
      %p33 = pneg %p27
      %p34 = scmp.eq.s32.totalorder %s18, 1
      %p35 = por %p33, %p34
      %p36 = scmp.ne.s32.totalorder %s28, %s31
      %p37 = scmp.eq.s32.totalorder %s18, 0
      %p38 = por %p36, %p37
      %p39 = scmp.ne.s32.totalorder %s28, %s31
      %p40 = scmp.eq.s32.totalorder %s23, 1
      %p41 = por %p39, %p40
      %p42 = scmp.ne.s32.totalorder %s31, %s32
      %p43 = scmp.eq.s32.totalorder %s23, 0
      %p44 = por %p42, %p43
      %p45 = scmp.ne.s32.totalorder %s31, %s32
      %p46 = scmp.eq.s32.totalorder %s24, 1
      %p47 = por %p45, %p46
      %p49 = scmp.ne.s32.totalorder %s32, %s48
      %p50 = scmp.eq.s32.totalorder %s24, 0
      %p51 = por %p49, %p50
      %s52 = sld [smem:[#allocation3 + %s18]]
      %s53 = sld [smem:[#allocation3 + %s25]]
      %s54 = ssub.s32 %s52, %s53
      %p55 = scmp.eq.s32.totalorder %s54, 0
      %s57 = sadd.s32 %s56, 1
      %s58 = scalar_select %p55, %s56, %s57
      %p61 = pneg %p55
      %p62 = scmp.eq.s32.totalorder %s18, 1
      %p63 = por %p61, %p62
      %p64 = scmp.ne.s32.totalorder %s56, %s59
      %p65 = scmp.eq.s32.totalorder %s18, 0
      %p66 = por %p64, %p65
      %p67 = scmp.ne.s32.totalorder %s56, %s59
      %p68 = scmp.eq.s32.totalorder %s23, 1
      %p69 = por %p67, %p68
      %p70 = scmp.ne.s32.totalorder %s59, %s60
      %p71 = scmp.eq.s32.totalorder %s23, 0
      %p72 = por %p70, %p71
      %p73 = scmp.ne.s32.totalorder %s59, %s60
      %p74 = scmp.eq.s32.totalorder %s24, 1
      %p75 = por %p73, %p74
      %p77 = scmp.ne.s32.totalorder %s60, %s76
      %p78 = scmp.eq.s32.totalorder %s24, 0
      %p79 = por %p77, %p78
      %s80 = ssub.s32 %s18, %s25
      %p81 = scmp.eq.s32.totalorder %s80, 0
      %s83 = sadd.s32 %s82, 1
      %s84 = scalar_select %p81, %s82, %s83
      %p87 = pneg %p81
      %p88 = scmp.eq.s32.totalorder %s18, 1
      %p89 = por %p87, %p88
      %p90 = scmp.ne.s32.totalorder %s82, %s85
      %p91 = scmp.eq.s32.totalorder %s18, 0
      %p92 = por %p90, %p91
      %p93 = scmp.ne.s32.totalorder %s82, %s85
      %p94 = scmp.eq.s32.totalorder %s23, 1
      %p95 = por %p93, %p94
      %p96 = scmp.ne.s32.totalorder %s85, %s86
      %p97 = scmp.eq.s32.totalorder %s23, 0
      %p98 = por %p96, %p97
      %p99 = scmp.ne.s32.totalorder %s85, %s86
      %p100 = scmp.eq.s32.totalorder %s24, 1
      %p101 = por %p99, %p100
      %p103 = scmp.ne.s32.totalorder %s86, %s102
      %p104 = scmp.eq.s32.totalorder %s24, 0
      %p105 = por %p103, %p104
      %p106 = scmp.le.s32.totalorder 1, %s18
      %p107 = scmp.lt.s32.totalorder %s18, 3
      %p108 = pnand %p106, %p107
      %p109 = pneg %p108
      // Predicated region
      $region9: #{tpu_custom_call.1} parent=5 // pred_check
        _
      $region10: #{tpu_custom_call.1} parent=5 // pred_check_branch
        %111 = sbr.rel (%p108) target = $region12
      $region11: #{tpu_custom_call.1} parent=5 // pred_region
        %s112 = ssub.s32 %s18, 1
      $region12: #{tpu_custom_call.1} parent=5 // pred_fallthru
        _
      %p113 = scmp.lt.s32.totalorder %s18, 2
      // Predicated region
      $region13: #{tpu_custom_call.1} parent=5 // pred_check
        %p114 = pneg %p113
      $region14: #{tpu_custom_call.1} parent=5 // pred_check_branch
        %116 = sbr.rel (%p114) target = $region16
      $region15: #{tpu_custom_call.1} parent=5 // pred_region
        // Predicated region
        $region17: #{tpu_custom_call.1} parent=15 // pred_check
          %p117 = pneg %p38
        $region18: #{tpu_custom_call.1} parent=15 // pred_check_branch
          %119 = sbr.rel (%p117) target = $region20
        $region19: #{tpu_custom_call.1} parent=15 // pred_region
          %s120 = smul.u32 16, %s18
          %p121 = scmp.lt.s32.totalorder %s120, 31
          %s122 = scalar_select %p121, %s120, 31
          %s123 = smul.addr %s122, 8
          %s124 = scalar_lea.vmem %s1, %s123
          %s125 = smul.u32 16, %s18
        $region20: #{tpu_custom_call.1} parent=15 // pred_fallthru
          _
        // Predicated region
        $region21: #{tpu_custom_call.1} parent=15 // pred_check
          %p126 = pneg %p66
        $region22: #{tpu_custom_call.1} parent=15 // pred_check_branch
          %128 = sbr.rel (%p126) target = $region24
        $region23: #{tpu_custom_call.1} parent=15 // pred_region
          %s129 = sld [smem:[#allocation3 + %s18]]
          %p130 = scmp.lt.s32.totalorder %s129, 1
          %s131 = scalar_select %p130, %s129, 1
          %s132 = smul.addr %s131, 2
          %s133 = smul.addr %s132, 4
          %s134 = scalar_lea.vmem %s2, %s133
          %s135 = sld [smem:[#allocation3 + %s18]]
        $region24: #{tpu_custom_call.1} parent=15 // pred_fallthru
          _
      $region16: #{tpu_custom_call.1} parent=5 // pred_fallthru
        _
      %p136 = scmp.le.s32.totalorder 1, %s18
      %p137 = scmp.lt.s32.totalorder %s18, 3
      %p138 = pnand %p136, %p137
      %p139 = pneg %p138
      // Predicated region
      $region25: #{tpu_custom_call.1} parent=5 // pred_check
        _
      $region26: #{tpu_custom_call.1} parent=5 // pred_check_branch
        %141 = sbr.rel (%p138) target = $region28
      $region27: #{tpu_custom_call.1} parent=5 // pred_region
        %s142 = ssub.s32 %s18, 1
        %s143 = smul.u32 16, %s23
        %p144 = scmp.lt.s32.totalorder %s143, 31
        %s145 = scalar_select %p144, %s143, 31
        %s146 = smul.addr %s145, 8
        %s147 = scalar_lea.vmem %s1, %s146
        %p148 = pneg %p44
        %p149 = pneg %p41
        %s150 = sld [smem:[#allocation3 + %s23]]
        %p151 = scmp.lt.s32.totalorder %s150, 1
        %s152 = scalar_select %p151, %s150, 1
        %s153 = smul.addr %s152, 2
        %s154 = smul.addr %s153, 4
        %s155 = scalar_lea.vmem %s2, %s154
        %p156 = pneg %p72
        %p157 = pneg %p69
        %p158 = pneg %p98
        %p159 = pneg %p95
        %s160 = sand.u32 %s85, 1
        %s161 = scalar_lea.sflag [#allocation5], %s160
        %s162 = sand.u32 %s85, 1
        %s163 = smul.addr %s162, 64
        %s164 = scalar_lea.vmem [#allocation4], %s163
        %s165 = smul.u32 16, %s23
        %p166 = scmp.lt.s32.totalorder %s165, 31
        %s167 = scalar_select %p166, %s165, 31
        %s168 = smul.addr %s167, 8
        %s169 = scalar_lea.vmem %s1, %s168
        %s170 = smul.u32 16, %s23
        %s171 = sld [smem:[#allocation3 + %s23]]
        %p172 = scmp.lt.s32.totalorder %s171, 1
        %s173 = scalar_select %p172, %s171, 1
        %s174 = smul.addr %s173, 2
        %s175 = smul.addr %s174, 4
        %s176 = scalar_lea.vmem %s2, %s175
        %s177 = sld [smem:[#allocation3 + %s23]]
        %s178 = smul.u32 16, %s23
        %v180 = vld [vmem:[%s169] sm:$0xff]
        %v181 = vld [vmem:[%s169 + $0x8] sm:$0xff]
        %v182 = vld [vmem:[%s169 + $0x10] sm:$0xff]
        %v183 = vld [vmem:[%s169 + $0x18] sm:$0xff]
        %v184 = vld [vmem:[%s169 + $0x20] sm:$0xff]
        %v185 = vld [vmem:[%s169 + $0x28] sm:$0xff]
        %v186 = vld [vmem:[%s169 + $0x30] sm:$0xff]
        %v187 = vld [vmem:[%s169 + $0x38] sm:$0xff]
        %v188 = vld [vmem:[%s169 + $0x40] sm:$0xff]
        %v189 = vld [vmem:[%s169 + $0x48] sm:$0xff]
        %v190 = vld [vmem:[%s169 + $0x50] sm:$0xff]
        %v191 = vld [vmem:[%s169 + $0x58] sm:$0xff]
        %v192 = vld [vmem:[%s169 + $0x60] sm:$0xff]
        %v193 = vld [vmem:[%s169 + $0x68] sm:$0xff]
        %v194 = vld [vmem:[%s169 + $0x70] sm:$0xff]
        %v195 = vld [vmem:[%s169 + $0x78] sm:$0xff]
        %v196 = vpack.c.bf16 %v181, %v180
        %v197 = vpack.c.bf16 %v183, %v182
        %v198 = vpack.c.bf16 %v185, %v184
        %v199 = vpack.c.bf16 %v187, %v186
        %v200 = vpack.c.bf16 %v189, %v188
        %v201 = vpack.c.bf16 %v191, %v190
        %v202 = vpack.c.bf16 %v193, %v192
        %v203 = vpack.c.bf16 %v195, %v194
        %v204 = vld [vmem:[%s176] sm:$0xf]
        %v205 = vld [vmem:[%s176 + $0x4] sm:$0xf]
        %v208 = vunpack.c.l.b16 %v204
        %v209 = vunpack.c.l.b16 %v205
        %v210 = vpack.c.b16 %v209, %v208
        %vm212 = vcmask 130048
        %v214 = vsel %vm212, %v196, 0
        %v217 = vsel %vm212, %v197, 0
        %v220 = vsel %vm212, %v198, 0
        %v223 = vsel %vm212, %v199, 0
        %v226 = vsel %vm212, %v200, 0
        %v229 = vsel %vm212, %v201, 0
        %v232 = vsel %vm212, %v202, 0
        %v235 = vsel %vm212, %v203, 0
        %237 = vmatprep.subr.bf16.mxu0 0
        %238 = vmatpush1.bf16.msra.mxu0 %v210
        %239 = vmatprep.subr.bf16.mxu0 0
        %240 = vmatpush1.bf16.msra.mxu0 0
        %241 = vmatprep.subr.bf16.mxu0 0
        %242 = vmatpush1.bf16.msra.mxu0 0
        %243 = vmatprep.subr.bf16.mxu0 0
        %244 = vmatpush1.bf16.msra.mxu0 0
        %245 = vmatprep.subr.bf16.mxu0 0
        %246 = vmatpush1.bf16.msra.mxu0 0
        %247 = vmatprep.subr.bf16.mxu0 0
        %248 = vmatpush1.bf16.msra.mxu0 0
        %249 = vmatprep.subr.bf16.mxu0 0
        %250 = vmatpush1.bf16.msra.mxu0 0
        %251 = vmatprep.subr.bf16.mxu0 0
        %252 = vmatpush1.bf16.msra.mxu0 0
        %253 = vmatprep.subr.bf16.mxu0 0
        %254 = vmatpush1.bf16.msra.mxu0 0
        %255 = vmatprep.subr.bf16.mxu0 0
        %256 = vmatpush1.bf16.msra.mxu0 0
        %257 = vmatprep.subr.bf16.mxu0 0
        %258 = vmatpush1.bf16.msra.mxu0 0
        %259 = vmatprep.subr.bf16.mxu0 0
        %260 = vmatpush1.bf16.msra.mxu0 0
        %261 = vmatprep.subr.bf16.mxu0 0
        %262 = vmatpush1.bf16.msra.mxu0 0
        %263 = vmatprep.subr.bf16.mxu0 0
        %264 = vmatpush1.bf16.msra.mxu0 0
        %265 = vmatprep.subr.bf16.mxu0 0
        %266 = vmatpush1.bf16.msra.mxu0 0
        %267 = vmatprep.subr.bf16.mxu0 0
        %268 = vmatpush1.bf16.msra.mxu0 0
        %269 = vmatprep.mubr.bf16.mxu0 0
        %270 = vmatmul.mubr.bf16.gmra.mrb[0].mxu0 %v214
        %v271 = vpop.f32.mrb[0].mxu0
        %v272 = vadd.f32 0.0, %v271
        %v273 = vpop.f32.mrb[0].mxu0
        %v274 = vpop.f32.mrb[0].mxu0
        %v275 = vadd.f32 0.0, %v274
        %v276 = vpop.f32.mrb[0].mxu0
        %277 = vmatprep.mubr.bf16.mxu0 0
        %278 = vmatmul.mubr.bf16.gmra.mrb[0].mxu0 %v217
        %v279 = vpop.f32.mrb[0].mxu0
        %v280 = vadd.f32 0.0, %v279
        %v281 = vpop.f32.mrb[0].mxu0
        %v282 = vpop.f32.mrb[0].mxu0
        %v283 = vadd.f32 0.0, %v282
        %v284 = vpop.f32.mrb[0].mxu0
        %285 = vmatprep.mubr.bf16.mxu0 0
        %286 = vmatmul.mubr.bf16.gmra.mrb[0].mxu0 %v220
        %v287 = vpop.f32.mrb[0].mxu0
        %v288 = vadd.f32 0.0, %v287
        %v289 = vpop.f32.mrb[0].mxu0
        %v290 = vpop.f32.mrb[0].mxu0
        %v291 = vadd.f32 0.0, %v290
        %v292 = vpop.f32.mrb[0].mxu0
        %293 = vmatprep.mubr.bf16.mxu0 0
        %294 = vmatmul.mubr.bf16.gmra.mrb[0].mxu0 %v223
        %v295 = vpop.f32.mrb[0].mxu0
        %v296 = vadd.f32 0.0, %v295
        %v297 = vpop.f32.mrb[0].mxu0
        %v298 = vpop.f32.mrb[0].mxu0
        %v299 = vadd.f32 0.0, %v298
        %v300 = vpop.f32.mrb[0].mxu0
        %301 = vmatprep.mubr.bf16.mxu0 0
        %302 = vmatmul.mubr.bf16.gmra.mrb[0].mxu0 %v226
        %v303 = vpop.f32.mrb[0].mxu0
        %v304 = vadd.f32 0.0, %v303
        %v305 = vpop.f32.mrb[0].mxu0
        %v306 = vpop.f32.mrb[0].mxu0
        %v307 = vadd.f32 0.0, %v306
        %v308 = vpop.f32.mrb[0].mxu0
        %309 = vmatprep.mubr.bf16.mxu0 0
        %310 = vmatmul.mubr.bf16.gmra.mrb[0].mxu0 %v229
        %v311 = vpop.f32.mrb[0].mxu0
        %v312 = vadd.f32 0.0, %v311
        %v313 = vpop.f32.mrb[0].mxu0
        %v314 = vpop.f32.mrb[0].mxu0
        %v315 = vadd.f32 0.0, %v314
        %v316 = vpop.f32.mrb[0].mxu0
        %317 = vmatprep.mubr.bf16.mxu0 0
        %318 = vmatmul.mubr.bf16.gmra.mrb[0].mxu0 %v232
        %v319 = vpop.f32.mrb[0].mxu0
        %v320 = vadd.f32 0.0, %v319
        %v321 = vpop.f32.mrb[0].mxu0
        %v322 = vpop.f32.mrb[0].mxu0
        %v323 = vadd.f32 0.0, %v322
        %v324 = vpop.f32.mrb[0].mxu0
        %325 = vmatprep.mubr.bf16.mxu0 0
        %326 = vmatmul.mubr.bf16.gmra.mrb[0].mxu0 %v235
        %v327 = vpop.f32.mrb[0].mxu0
        %v328 = vadd.f32 0.0, %v327
        %v329 = vpop.f32.mrb[0].mxu0
        %v330 = vpop.f32.mrb[0].mxu0
        %v331 = vadd.f32 0.0, %v330
        %v332 = vpop.f32.mrb[0].mxu0
        %333 = vdwg.mxu0
        %v334 = vpack.c.bf16 %v275, %v272
        %v335 = vpack.c.bf16 %v283, %v280
        %v336 = vpack.c.bf16 %v291, %v288
        %v337 = vpack.c.bf16 %v299, %v296
        %v338 = vpack.c.bf16 %v307, %v304
        %v339 = vpack.c.bf16 %v315, %v312
        %v340 = vpack.c.bf16 %v323, %v320
        %v341 = vpack.c.bf16 %v331, %v328
        %v350 = vunpack.c.l.b16 %v334
        %v351 = vunpack.c.h.b16 %v334
        %v352 = vunpack.c.l.b16 %v335
        %v353 = vunpack.c.h.b16 %v335
        %v354 = vunpack.c.l.b16 %v336
        %v355 = vunpack.c.h.b16 %v336
        %v356 = vunpack.c.l.b16 %v337
        %v357 = vunpack.c.h.b16 %v337
        %v358 = vunpack.c.l.b16 %v338
        %v359 = vunpack.c.h.b16 %v338
        %v360 = vunpack.c.l.b16 %v339
        %v361 = vunpack.c.h.b16 %v339
        %v362 = vunpack.c.l.b16 %v340
        %v363 = vunpack.c.h.b16 %v340
        %v364 = vunpack.c.l.b16 %v341
        %v365 = vunpack.c.h.b16 %v341
        %v366 = vpack.c.b16 %v350, %v350
        %v367 = vpack.c.b16 %v351, %v351
        %v368 = vpack.c.b16 %v352, %v352
        %v369 = vpack.c.b16 %v353, %v353
        %v370 = vpack.c.b16 %v354, %v354
        %v371 = vpack.c.b16 %v355, %v355
        %v372 = vpack.c.b16 %v356, %v356
        %v373 = vpack.c.b16 %v357, %v357
        %v374 = vpack.c.b16 %v358, %v358
        %v375 = vpack.c.b16 %v359, %v359
        %v376 = vpack.c.b16 %v360, %v360
        %v377 = vpack.c.b16 %v361, %v361
        %v378 = vpack.c.b16 %v362, %v362
        %v379 = vpack.c.b16 %v363, %v363
        %v380 = vpack.c.b16 %v364, %v364
        %v381 = vpack.c.b16 %v365, %v365
        %398 = vst [vmem:[%s164] sm:$0xf] %v366
        %399 = vst [vmem:[%s164 + $0x4] sm:$0xf] %v367
        %400 = vst [vmem:[%s164 + $0x8] sm:$0xf] %v368
        %401 = vst [vmem:[%s164 + $0xc] sm:$0xf] %v369
        %402 = vst [vmem:[%s164 + $0x10] sm:$0xf] %v370
        %403 = vst [vmem:[%s164 + $0x14] sm:$0xf] %v371
        %404 = vst [vmem:[%s164 + $0x18] sm:$0xf] %v372
        %405 = vst [vmem:[%s164 + $0x1c] sm:$0xf] %v373
        %406 = vst [vmem:[%s164 + $0x20] sm:$0xf] %v374
        %407 = vst [vmem:[%s164 + $0x24] sm:$0xf] %v375
        %408 = vst [vmem:[%s164 + $0x28] sm:$0xf] %v376
        %409 = vst [vmem:[%s164 + $0x2c] sm:$0xf] %v377
        %410 = vst [vmem:[%s164 + $0x30] sm:$0xf] %v378
        %411 = vst [vmem:[%s164 + $0x34] sm:$0xf] %v379
        %412 = vst [vmem:[%s164 + $0x38] sm:$0xf] %v380
        %413 = vst [vmem:[%s164 + $0x3c] sm:$0xf] %v381
        %s414 = sand.u32 %s85, 1
        %s415 = scalar_lea.sflag [#allocation5], %s414
        %s416 = sand.u32 %s85, 1
        %s417 = smul.addr %s416, 64
        %s418 = scalar_lea.vmem [#allocation4], %s417
        // Predicated region
        $region29: #{tpu_custom_call.1} parent=27 // pred_check
          %p419 = pneg %p95
        $region30: #{tpu_custom_call.1} parent=27 // pred_check_branch
          %421 = sbr.rel (%p419) target = $region32
        $region31: #{tpu_custom_call.1} parent=27 // pred_region
          %s422 = smul.u32 16, %s23
          %s424 = ssub.s32 1024, 1024
          %425 = vsyncadd %s415, %s424
          %s426 = smul.addr %s422, 64
          %s427 = scalar_lea.hbm %s3, %s426
          %s428 = sshll.u32 %s418, 4
          %s429 = int_to_ptr.vmem [resolvable:$true] %s428
          %434 = dma.vmem_to_hbm [thread:$0]  %s429, 1024, %s427, %s415, 64, 64, 4
        $region32: #{tpu_custom_call.1} parent=27 // pred_fallthru
          _
      $region28: #{tpu_custom_call.1} parent=5 // pred_fallthru
        _
      %p435 = scmp.le.s32.totalorder 2, %s18
      // Predicated region
      $region33: #{tpu_custom_call.1} parent=5 // pred_check
        %p436 = pneg %p435
      $region34: #{tpu_custom_call.1} parent=5 // pred_check_branch
        %438 = sbr.rel (%p436) target = $region36
      $region35: #{tpu_custom_call.1} parent=5 // pred_region
        %s439 = ssub.s32 %s18, 2
        // Predicated region
        $region37: #{tpu_custom_call.1} parent=35 // pred_check
          %p440 = pneg %p101
        $region38: #{tpu_custom_call.1} parent=35 // pred_check_branch
          %442 = sbr.rel (%p440) target = $region40
        $region39: #{tpu_custom_call.1} parent=35 // pred_region
          %s443 = sand.u32 %s86, 1
          %s444 = scalar_lea.sflag [#allocation5], %s443
          %s445 = sand.u32 %s86, 1
          %s446 = smul.addr %s445, 64
          %s447 = scalar_lea.vmem [#allocation4], %s446
          %448 = dma.done %s444, 1024
        $region40: #{tpu_custom_call.1} parent=35 // pred_fallthru
          _
      $region36: #{tpu_custom_call.1} parent=5 // pred_fallthru
        _
    $region6: #{tpu_custom_call.1} parent=1 // loop_footer
      %s22 = sadd.s32 1, %s18
    $region7: #{tpu_custom_call.1} parent=1 // loop_footer_branch
      %17 = sbr.rel target = $region3
    $region8: #{tpu_custom_call.1} parent=1 // loop_exit
      _
    %449 = vsyncpa [#allocation5], 1
    %s450 = scalar_lea.sflag [#allocation5], 1
    %451 = vsyncpa %s450, 1

</llo_original>
